<compile_context>
chip_gen: v5e
topology: v5e:2x2
jax: 0.10.0
libtpu: 0.0.40
codegen_flags: <defaults>
</compile_context>

<pallas_src>
import math

import jax
import jax.numpy as jnp
from jax.experimental import pallas as pl
from jax.experimental.pallas import tpu as pltpu


def make_positional_encoding(d_model: int, max_len: int, dtype=jnp.float32) -> jnp.ndarray:
    """Deterministic buffer init, identical to the PyTorch __init__ (cast ONCE here)."""
    assert d_model % 2 == 0, "sinusoidal positional encoding requires an even d_model"
    position = jnp.arange(max_len, dtype=jnp.float32)[:, None]              # (max_len, 1)
    div_term = jnp.exp(
        jnp.arange(0, d_model, 2, dtype=jnp.float32) * (-math.log(10000.0) / d_model)
    )                                                                        # (d_model//2,)
    pe = jnp.zeros((max_len, d_model), dtype=jnp.float32)
    pe = pe.at[:, 0::2].set(jnp.sin(position * div_term))
    pe = pe.at[:, 1::2].set(jnp.cos(position * div_term))
    return pe.astype(dtype)


def _pe_add_kernel(x_ref, pe_ref, o_ref):
    # x_ref: (bb, tr, lanes); pe_ref: (tr, lanes); broadcast add over the batch dim.
    # Accumulate in the promoted dtype (== o_ref.dtype), matching PyTorch promotion.
    o_ref[...] = x_ref[...].astype(o_ref.dtype) + pe_ref[...].astype(o_ref.dtype)


def _vmem_budgets():
    """(vmem_limit_bytes, working_set_budget_bytes) sized per TPU generation."""
    vmem_cap = 64 * 1024 * 1024                       # conservative default (v7x-safe)
    try:
        info = pltpu.get_tpu_info()
        vmem_cap = int(getattr(info, "vmem_capacity_bytes", vmem_cap))
    except Exception:
        pass
    if vmem_cap >= 96 * 1024 * 1024:                  # v5e / v6e: 128 MiB physical
        return 64 * 1024 * 1024, 48 * 1024 * 1024
    return 32 * 1024 * 1024, 24 * 1024 * 1024         # v7x: 64 MiB physical


def positional_encoder_forward(
    x: jnp.ndarray,
    pe: jnp.ndarray,
    *,
    donate_x: bool = False,
    working_set_budget: int | None = None,   # test/tuning override
) -> jnp.ndarray:
    """
    x:  (batch, seq_len, d_model)
    pe: (max_len, d_model) with max_len >= seq_len
    returns x + pe[:seq_len, :] broadcast over batch, shape (batch, seq_len, d_model),
    dtype = promote_types(x.dtype, pe.dtype) (PyTorch promotion semantics).
    """
    b, s, d = x.shape
    max_len, d_pe = pe.shape
    if d_pe != d:
        raise ValueError(f"pe d_model {d_pe} != input d_model {d}")
    if s > max_len:
        raise ValueError(f"seq_len {s} exceeds positional-encoding max_len {max_len}")

    out_dtype = jnp.promote_types(x.dtype, pe.dtype)
    x_bytes = jnp.dtype(x.dtype).itemsize
    pe_bytes = jnp.dtype(pe.dtype).itemsize
    out_bytes = jnp.dtype(out_dtype).itemsize

    vmem_limit, budget = _vmem_budgets()
    if working_set_budget is not None:
        budget = working_set_budget

    # ---- choose a lane-dense 2D view of the (seq, d_model) plane ----------------
    if d % 128 == 0:
        rows, lanes = s, d
        x_in = x
        pe_in = pe                      # full buffer; index_map picks the first s rows
    elif (s * d) % 128 == 0:
        # Fold seq into the lane dim so output stores are unmasked full-lane vst.
        lanes = 128
        rows = (s * d) // 128
        x_in = x.reshape(b, rows, lanes)
        pe_in = jax.lax.slice(pe, (0, 0), (s, d)).reshape(rows, lanes)
    else:
        # Awkward d_model: full-width blocks (correct; stores may be masked).
        rows, lanes = s, d
        x_in = x
        pe_in = pe if max_len == s else jax.lax.slice(pe, (0, 0), (s, d))

    # ---- pick (bb, tr): pack batch first, tile seq only if a full-seq slab -------
    # for one batch element does not fit the (double-buffered) working-set budget.
    sublane = max(8, 32 // x_bytes)     # 8 rows for f32, 16 for bf16, 32 for 8-bit
    pe_slab = 2 * rows * lanes * pe_bytes                    # double-buffered pe tile
    per_batch = 2 * rows * lanes * (x_bytes + out_bytes)     # dbl-buffered x + out slab

    if pe_slab + per_batch <= budget:
        # Full seq fits: pack as many batch elements per step as the budget allows.
        tr = rows
        bb = max(1, min(b, (budget - pe_slab) // per_batch))
    else:
        # One batch element at a time; tile the seq/row dimension.
        bb = 1
        bytes_per_row = 2 * lanes * (x_bytes + out_bytes) + 2 * lanes * pe_bytes
        max_rows = max(1, budget // bytes_per_row)
        tr = max(sublane, (max_rows // sublane) * sublane)

    if tr % 8 != 0 and pe_in.shape[0] != tr:
        # Non-8-aligned row block must span pe's full row extent: trim once.
        pe_in = jax.lax.slice(pe_in, (0, 0), (tr, lanes))

    # Batch innermost -> pe block index is constant across consecutive steps,
    # so the pe tile is fetched once per seq tile and reused for every batch block.
    grid = (pl.cdiv(rows, tr), pl.cdiv(b, bb))

    extra_kwargs = {}
    if donate_x and out_dtype == x.dtype:
        extra_kwargs["input_output_aliases"] = {0: 0}

    out = pl.pallas_call(
        _pe_add_kernel,
        out_shape=jax.ShapeDtypeStruct((b, rows, lanes), out_dtype),
        grid_spec=pltpu.PrefetchScalarGridSpec(
            num_scalar_prefetch=0,
            grid=grid,
            in_specs=[
                pl.BlockSpec((bb, tr, lanes), lambda si, bi: (bi, si, 0)),
                pl.BlockSpec((tr, lanes), lambda si, bi: (si, 0)),
            ],
            out_specs=pl.BlockSpec((bb, tr, lanes), lambda si, bi: (bi, si, 0)),
        ),
        compiler_params=pltpu.CompilerParams(
            dimension_semantics=("parallel", "parallel"),
            vmem_limit_bytes=vmem_limit,
        ),
        **extra_kwargs,
    )(x_in, pe_in)

    return out.reshape(b, s, d)


if __name__ == "__main__":
    key = jax.random.PRNGKey(0)
    k1, k2, k3, k4 = jax.random.split(key, 4)

    # 1) Folded-lane path (d_model % 128 != 0, (seq*d) % 128 == 0), single step.
    batch, seq_len, d_model, max_len = 2, 8, 32, 16
    x = jax.random.normal(k1, (batch, seq_len, d_model), dtype=jnp.float32)
    pe = make_positional_encoding(d_model, max_len)
    out = jax.block_until_ready(positional_encoder_forward(x, pe))
    ref = x + pe[:seq_len, :][None, :, :]
    assert out.shape == x.shape and out.dtype == jnp.promote_types(x.dtype, pe.dtype)
    assert jnp.allclose(out, ref, atol=1e-6), "mismatch vs reference (folded-lane path)"

    # 2) Lane-dense d_model % 128 == 0 path, single step.
    b2, s2, d2, m2 = 2, 16, 256, 32
    x2 = jax.random.normal(k2, (b2, s2, d2), dtype=jnp.float32)
    pe2 = make_positional_encoding(d2, m2)
    out2 = jax.block_until_ready(positional_encoder_forward(x2, pe2))
    ref2 = x2 + pe2[:s2, :][None, :, :]
    assert out2.shape == x2.shape and out2.dtype == x2.dtype
    assert jnp.allclose(out2, ref2, atol=1e-6), "mismatch vs reference (lane-dense path)"

    # 3) Seq-tiled path with a partial last tile (tiny budget override forces tiling).
    b3, s3, d3, m3 = 3, 44, 128, 64
    x3 = jax.random.normal(k3, (b3, s3, d3), dtype=jnp.float32)
    pe3 = make_positional_encoding(d3, m3)
    out3 = jax.block_until_ready(
        positional_encoder_forward(x3, pe3, working_set_budget=32 * 1024))
    ref3 = x3 + pe3[:s3, :][None, :, :]
    assert jnp.allclose(out3, ref3, atol=1e-6), "mismatch vs reference (seq-tiled path)"

    # 4) Batch-packed path (bb > 1, multiple batch blocks, pe row trim).
    b4, s4, d4, m4 = 8, 44, 128, 64
    x4 = jax.random.normal(k4, (b4, s4, d4), dtype=jnp.float32)
    pe4 = make_positional_encoding(d4, m4)
    out4 = jax.block_until_ready(
        positional_encoder_forward(x4, pe4, working_set_budget=256 * 1024))
    ref4 = x4 + pe4[:s4, :][None, :, :]
    assert jnp.allclose(out4, ref4, atol=1e-6), "mismatch vs reference (batch-packed path)"

    print("KERNEL_OK")
</pallas_src>

<mosaic_0001>
module attributes {stable_mosaic.version = 11 : i64} {
  func.func @_pe_add_kernel(%arg0: i32, %arg1: i32, %arg2: memref<2x2x128xf32, #tpu.memory_space<vmem>>, %arg3: memref<2x128xf32, #tpu.memory_space<vmem>>, %arg4: memref<2x2x128xf32, #tpu.memory_space<vmem>>) attributes {dimension_semantics = [#tpu.dimension_semantics<parallel>, #tpu.dimension_semantics<parallel>], iteration_bounds = array<i64: 1, 1>, scalar_prefetch = 0 : i64, scratch_operands = 0 : i64, tpu.core_type = #tpu.core_type<tc>, window_params = [{transform_indices = @transform_0, window_bounds = array<i64: 2, 2, 128>}, {transform_indices = @transform_1, window_bounds = array<i64: 2, 128>}, {transform_indices = @transform_2, window_bounds = array<i64: 2, 2, 128>}]} {
    %c0 = arith.constant 0 : index
    %c0_0 = arith.constant 0 : index
    %c0_1 = arith.constant 0 : index
    %0 = vector.load %arg2[%c0, %c0_0, %c0_1] : memref<2x2x128xf32, #tpu.memory_space<vmem>>, vector<2x2x128xf32>
    %c0_2 = arith.constant 0 : index
    %c0_3 = arith.constant 0 : index
    %1 = vector.load %arg3[%c0_2, %c0_3] : memref<2x128xf32, #tpu.memory_space<vmem>>, vector<2x128xf32>
    %2 = vector.shape_cast %1 : vector<2x128xf32> to vector<1x2x128xf32>
    %3 = vector.broadcast %2 : vector<1x2x128xf32> to vector<2x2x128xf32>
    %4 = arith.addf %0, %3 : vector<2x2x128xf32>
    %c0_4 = arith.constant 0 : index
    %c0_5 = arith.constant 0 : index
    %c0_6 = arith.constant 0 : index
    %5 = vector.load %arg4[%c0_4, %c0_5, %c0_6] : memref<2x2x128xf32, #tpu.memory_space<vmem>>, vector<2x2x128xf32>
    tpu.vector_store %arg4[%c0_4, %c0_5, %c0_6], %4 {strides = array<i32>} : memref<2x2x128xf32, #tpu.memory_space<vmem>>, vector<2x2x128xf32>,
    return
  }
  func.func @transform_0(%arg0: i32, %arg1: i32) -> (i32, i32, i32) {
    %c0_i32 = arith.constant 0 : i32
    %c0_i32_0 = arith.constant 0 : i32
    return %arg1, %arg0, %c0_i32 : i32, i32, i32
  }
  func.func @transform_1(%arg0: i32, %arg1: i32) -> (i32, i32) {
    %c0_i32 = arith.constant 0 : i32
    %c0_i32_0 = arith.constant 0 : i32
    return %arg0, %c0_i32 : i32, i32
  }
  func.func @transform_2(%arg0: i32, %arg1: i32) -> (i32, i32, i32) {
    %c0_i32 = arith.constant 0 : i32
    %c0_i32_0 = arith.constant 0 : i32
    return %arg1, %arg0, %c0_i32 : i32, i32, i32
  }
}

</mosaic_0001>

<llo_original>
// kernel: tpu_custom_call.1
$region0: #{tpu_custom_call.1}
  #allocation0 [shape = 'u32[]', space=smem, size = 0x4, offset = 0x4, fixed_abs, tag = 'smem constant byte address 0x4 - core index']
  #allocation1 [shape = 'u32[72,128]{1,0:T(1,128)}', space=vmem, size = 0x9000, scoped, tag = 'internal scratch']
  %s0 = inlined_call_operand.hbm [shape: f32[2,2,128], index: 0, kind: input, shape index: {}]
  %s1 = inlined_call_operand.hbm [shape: f32[2,128], index: 1, kind: input, shape index: {}]
  %s2 = inlined_call_operand.hbm [shape: f32[2,2,128], index: 2, kind: output, shape index: {}]
  %s3 = sld [smem:[#allocation0]]
  $region26: #{tpu_custom_call.1} parent=0
    _
  %s5 = ssub.s32 1, %s3
  %s6 = scalar_select 0, %s5, %s3
  $region1: #{tpu_custom_call.1} parent=0
    #allocation2 [shape = 'u8[2048]{0}', space=vmem, size = 0x800, scoped, tag = 'input window, operand 0, single buffered']
    #allocation3 [shape = 's32[1]{0}', space=sflag, size = 0x4, scoped, tag = 'scoped memory for tpu_custom_call.1']
    #allocation4 [shape = 's32[1]{0}', space=sflag, size = 0x4, scoped, tag = 'scoped memory for tpu_custom_call.1']
    #allocation5 [shape = 'u8[1024]{0}', space=vmem, size = 0x400, scoped, tag = 'input window, operand 1, single buffered']
    #allocation6 [shape = 's32[1]{0}', space=sflag, size = 0x4, scoped, tag = 'scoped memory for tpu_custom_call.1']
    #allocation7 [shape = 'u8[2048]{0}', space=vmem, size = 0x800, scoped, tag = 'output window, operand 0, single buffered']
    %7 = vsyncpa [#allocation3], 0
    %8 = vsyncpa [#allocation6], 0
    %9 = vsyncpa [#allocation4], 0
    // Predicated region
    $region2: #{tpu_custom_call.1} parent=1 // pred_check
      _
    $region3: #{tpu_custom_call.1} parent=1 // pred_check_branch
      %11 = sbr.rel (0) target = $region5
    $region4: #{tpu_custom_call.1} parent=1 // pred_region
      %13 = vsyncadd [#allocation3], 0
      %s14 = sshll.u32 %s0, 4
      %s15 = int_to_ptr.hbm [resolvable:$true] %s14
      %s16 = sshll.u32 [#allocation2], 4
      %s17 = int_to_ptr.vmem [resolvable:$true] %s16
      %22 = dma.hbm_to_vmem [thread:$0]  %s15, 64, %s17, [#allocation3], 32, 32, 2
    $region5: #{tpu_custom_call.1} parent=1 // pred_fallthru
      _
    // Predicated region
    $region6: #{tpu_custom_call.1} parent=1 // pred_check
      _
    $region7: #{tpu_custom_call.1} parent=1 // pred_check_branch
      %24 = sbr.rel (0) target = $region9
    $region8: #{tpu_custom_call.1} parent=1 // pred_region
      %26 = vsyncadd [#allocation6], 0
      %s28 = sshll.u32 %s1, 4
      %s29 = int_to_ptr.hbm [resolvable:$true] %s28
      %s30 = sshll.u32 [#allocation5], 4
      %s31 = int_to_ptr.vmem [resolvable:$true] %s30
      %33 = dma.hbm_to_vmem [thread:$0]  %s29, 32, %s31, [#allocation6]
    $region9: #{tpu_custom_call.1} parent=1 // pred_fallthru
      _
    // Predicated region
    $region10: #{tpu_custom_call.1} parent=1 // pred_check
      _
    $region11: #{tpu_custom_call.1} parent=1 // pred_check_branch
      %35 = sbr.rel (0) target = $region13
    $region12: #{tpu_custom_call.1} parent=1 // pred_region
      %37 = dma.done [#allocation3], 64
    $region13: #{tpu_custom_call.1} parent=1 // pred_fallthru
      _
    // Predicated region
    $region14: #{tpu_custom_call.1} parent=1 // pred_check
      _
    $region15: #{tpu_custom_call.1} parent=1 // pred_check_branch
      %39 = sbr.rel (0) target = $region17
    $region16: #{tpu_custom_call.1} parent=1 // pred_region
      %41 = dma.done [#allocation6], 32
    $region17: #{tpu_custom_call.1} parent=1 // pred_fallthru
      _
    %v42 = vld [vmem:[#allocation2] sm:$0x3]
    %v43 = vld [vmem:[#allocation2 + $0x2] sm:$0x3]
    %v44 = vld [vmem:[#allocation5] sm:$0x3]
    %v45 = vadd.f32 %v42, %v44
    %v46 = vadd.f32 %v43, %v44
    %47 = vst [vmem:[#allocation7] sm:$0x3] %v45
    %48 = vst [vmem:[#allocation7 + $0x2] sm:$0x3] %v46
    // Predicated region
    $region18: #{tpu_custom_call.1} parent=1 // pred_check
      _
    $region19: #{tpu_custom_call.1} parent=1 // pred_check_branch
      %50 = sbr.rel (0) target = $region21
    $region20: #{tpu_custom_call.1} parent=1 // pred_region
      %52 = vsyncadd [#allocation4], 0
      %s53 = sshll.u32 [#allocation7], 4
      %s54 = int_to_ptr.vmem [resolvable:$true] %s53
      %s55 = sshll.u32 %s2, 4
      %s56 = int_to_ptr.hbm [resolvable:$true] %s55
      %61 = dma.vmem_to_hbm [thread:$0]  %s54, 64, %s56, [#allocation4], 32, 32, 2
    $region21: #{tpu_custom_call.1} parent=1 // pred_fallthru
      _
    // Predicated region
    $region22: #{tpu_custom_call.1} parent=1 // pred_check
      _
    $region23: #{tpu_custom_call.1} parent=1 // pred_check_branch
      %63 = sbr.rel (0) target = $region25
    $region24: #{tpu_custom_call.1} parent=1 // pred_region
      %65 = dma.done [#allocation4], 64
    $region25: #{tpu_custom_call.1} parent=1 // pred_fallthru
      _
    %66 = vsyncpa [#allocation3], 1
    %67 = vsyncpa [#allocation6], 1
    %68 = vsyncpa [#allocation4], 1

</llo_original>
